<compile_context>
chip_gen: v6e
topology: v6e:2x2x1
jax: 0.10.0
libtpu: 0.0.40
codegen_flags: <defaults>
</compile_context>

<pallas_src>
import functools

import numpy as np
import jax
import jax.numpy as jnp
from jax.experimental import pallas as pl
from jax.experimental.pallas import tpu as pltpu

# ---- synthetic "tools" constants (small, deterministic) ----
EMBEDDING_SIZE = 32
NUM_PC = 12
HARMONY_COMPONENTS = ("root", "quality")
HARMONY_COMPONENT_DIMS = (12, 10)
HEAD_DIMS = HARMONY_COMPONENT_DIMS + (NUM_PC,)   # (12, 10, 12)
TOTAL_OUT = sum(HEAD_DIMS)                       # 34


def _round_up(n, m):
    return ((n + m - 1) // m) * m


# ---------------- Pallas kernel ----------------
def _fused_heads_kernel(x_ref, w1_ref, b1_ref, w2_ref, b2_ref, seg_ref, consts_ref,
                        root_ref, qual_ref, pc_ref, *, head_dims):
    """All three heads fused: 2 MXU matmuls + one MXU segment-sum + EUP exp.

    x_ref     : (tn, E)   f32    rows of the flattened note embedding
    w1_ref    : (E, 3E)   bf16   concatenated first-layer weights
    b1_ref    : (1, 3E)   f32
    w2_ref    : (3E, DT)  bf16   block-diag second layer; pc columns are sign-flipped
    b2_ref    : (1, DT)   f32    pc entries sign-flipped
    seg_ref   : (DT, DT)  bf16   segment-sum matrix (ones blocks + identity on pc lanes)
    consts_ref: (8, DT)   f32    per-lane activation constants (see packing)
    outputs   : (tn,12) (tn,10) (tn,12) f32
    """
    d0, d1, d2 = head_dims

    # ---- 2-layer MLP, all heads fused (bf16 MXU feed, f32 accumulate) ----
    x = x_ref[...].astype(jnp.bfloat16)                                   # cast in-kernel
    h = jnp.dot(x, w1_ref[...], preferred_element_type=jnp.float32)       # (tn, 3E)
    h = jnp.maximum(h + b1_ref[...], 0.0)
    logits = jnp.dot(h.astype(jnp.bfloat16), w2_ref[...],
                     preferred_element_type=jnp.float32) + b2_ref[...]    # (tn, DT)
    # logits = [root | quality | -pc_logit]  (sign flip folded into W2/b2)

    # ---- per-lane constants ----
    offsel = consts_ref[0:1, :]   # 1 on softmax lanes, 0 on sigmoid lanes
    c_den  = consts_ref[1:2, :]   # +1 on sigmoid lanes (denominator 1 + e)
    fix_a  = consts_ref[2:3, :]   # 0 softmax / 1 sigmoid
    fix_b  = consts_ref[3:4, :]   # 1 softmax / -1 sigmoid
    big    = consts_ref[4:5, :]   # 0 softmax / 1e30 sigmoid (excludes pc lanes from max)

    # Single XLU reduction: per-row max over the softmax lanes only.
    m = jnp.max(logits - big, axis=-1, keepdims=True)                     # (tn, 1)
    arg = jnp.minimum(logits - offsel * m, 60.0)                          # stability clamp
    # Round exp() to bf16 so the MXU segment-sum and the numerator use the exact same
    # values: softmax rows then sum to 1 up to f32 rounding (exact division below).
    e16 = jnp.exp(arg).astype(jnp.bfloat16)                               # EUP exp
    e = e16.astype(jnp.float32)

    # Per-lane denominators in ONE MXU op: softmax lanes get their segment sum,
    # sigmoid lanes get e (identity column) and c_den adds the +1.
    denom = jnp.dot(e16, seg_ref[...], preferred_element_type=jnp.float32) + c_den
    out = fix_a + fix_b * (e / denom)   # softmax: e/sum ; sigmoid: 1 - e/(1+e) = sigmoid

    root_ref[...] = out[:, :d0]
    qual_ref[...] = out[:, d0:d0 + d1]
    pc_ref[...]   = out[:, d0 + d1:]


# ---------------- one-time fused parameter packing (hoisted out of forward) ----------------
def pack_frame_level_decoder_params(params):
    w1r, b1r, w2r, b2r = params["root"]
    w1q, b1q, w2q, b2q = params["quality"]
    w1p, b1p, w2p, b2p = params["pc"]
    E = EMBEDDING_SIZE
    d0, d1, d2 = HEAD_DIMS
    dt = TOTAL_OUT

    w1_cat = jnp.concatenate([w1r, w1q, w1p], axis=1)                  # (E, 3E)
    b1_cat = jnp.concatenate([b1r, b1q, b1p], axis=1)                  # (1, 3E)

    # Block-diagonal second layer; the pc (sigmoid) block carries a sign flip so the
    # kernel's unified exp(arg) path computes exp(-pc_logit).
    w2_cat = jnp.zeros((3 * E, dt), jnp.float32)
    w2_cat = w2_cat.at[0:E, 0:d0].set(w2r)
    w2_cat = w2_cat.at[E:2 * E, d0:d0 + d1].set(w2q)
    w2_cat = w2_cat.at[2 * E:3 * E, d0 + d1:].set(-w2p)
    b2_cat = jnp.concatenate([b2r, b2q, -b2p], axis=1)                 # (1, DT)

    lane = np.arange(dt)
    seg0 = lane < d0
    seg1 = (lane >= d0) & (lane < d0 + d1)
    seg2 = lane >= d0 + d1
    # (DT, DT) segment-sum matrix: all-ones block within each softmax segment,
    # identity on sigmoid lanes.
    seg_mat = (np.outer(seg0, seg0) | np.outer(seg1, seg1) | np.diag(seg2)).astype(np.float32)

    consts = np.zeros((8, dt), np.float32)
    consts[0] = (~seg2).astype(np.float32)                 # offsel
    consts[1] = seg2.astype(np.float32)                    # c_den
    consts[2] = seg2.astype(np.float32)                    # fix_a
    consts[3] = 1.0 - 2.0 * seg2.astype(np.float32)        # fix_b
    consts[4] = 1e30 * seg2.astype(np.float32)             # big

    return dict(
        w1=w1_cat.astype(jnp.bfloat16), b1=b1_cat,
        w2=w2_cat.astype(jnp.bfloat16), b2=b2_cat,
        seg=jnp.asarray(seg_mat, jnp.bfloat16),
        consts=jnp.asarray(consts, jnp.float32),
    )


# ---------------- parameter init (deterministic) ----------------
def _init_head_params(key, in_dim, hidden_dim, out_dim):
    k1, k2, k3, k4 = jax.random.split(key, 4)
    w1 = 0.02 * jax.random.normal(k1, (in_dim, hidden_dim), jnp.float32)
    b1 = 0.02 * jax.random.normal(k2, (1, hidden_dim), jnp.float32)
    w2 = 0.02 * jax.random.normal(k3, (hidden_dim, out_dim), jnp.float32)
    b2 = 0.02 * jax.random.normal(k4, (1, out_dim), jnp.float32)
    return (w1, b1, w2, b2)


def init_frame_level_decoder_params(key):
    params = {}
    keys = jax.random.split(key, len(HARMONY_COMPONENTS) + 1)
    for i, (comp, dim) in enumerate(zip(HARMONY_COMPONENTS, HARMONY_COMPONENT_DIMS)):
        params[comp] = _init_head_params(keys[i], EMBEDDING_SIZE, EMBEDDING_SIZE, dim)
    params["pc"] = _init_head_params(keys[-1], EMBEDDING_SIZE, EMBEDDING_SIZE, NUM_PC)
    return params


# ---------------- forward (matches FrameLevelDecoder.forward, nade_output=False) ----------------
def frame_level_decoder_forward(note_embedding, packed, *, max_tile_n=4096):
    """note_embedding: (B, T, EMBEDDING_SIZE) float32; packed = pack_frame_level_decoder_params(...)."""
    B, T, E = note_embedding.shape
    assert E == EMBEDDING_SIZE
    N = B * T
    d0, d1, d2 = HEAD_DIMS
    H = packed["w1"].shape[1]    # 3E = 96
    DT = TOTAL_OUT               # 34

    # Large row tiles (streaming/mem-bound kernel); grid handles a partial last tile so
    # no padded copy of x is ever materialized.  For big N make sure there are at least
    # two grid steps so v7x's 2 TensorCores both get work on the "parallel" axis.
    tn = min(max_tile_n, _round_up(N, 8))
    if N > 1024 and pl.cdiv(N, tn) < 2:
        tn = _round_up(pl.cdiv(N, 2), 8)
    grid = (pl.cdiv(N, tn),)

    x2d = note_embedding.reshape(N, E)   # stays f32; bf16 cast happens inside the kernel

    out_shapes = (jax.ShapeDtypeStruct((N, d0), jnp.float32),
                  jax.ShapeDtypeStruct((N, d1), jnp.float32),
                  jax.ShapeDtypeStruct((N, d2), jnp.float32))

    root, qual, pc = pl.pallas_call(
        functools.partial(_fused_heads_kernel, head_dims=HEAD_DIMS),
        out_shape=out_shapes,
        grid_spec=pltpu.PrefetchScalarGridSpec(
            num_scalar_prefetch=0,
            grid=grid,
            in_specs=[
                pl.BlockSpec((tn, E), lambda i: (i, 0)),     # x rows (streamed, f32)
                pl.BlockSpec((E, H), lambda i: (0, 0)),      # W1_cat (resident, bf16)
                pl.BlockSpec((1, H), lambda i: (0, 0)),      # b1_cat
                pl.BlockSpec((H, DT), lambda i: (0, 0)),     # W2_cat (block-diag, bf16)
                pl.BlockSpec((1, DT), lambda i: (0, 0)),     # b2_cat
                pl.BlockSpec((DT, DT), lambda i: (0, 0)),    # segment-sum matrix
                pl.BlockSpec((8, DT), lambda i: (0, 0)),     # activation constants
            ],
            out_specs=[
                pl.BlockSpec((tn, d0), lambda i: (i, 0)),    # root probs
                pl.BlockSpec((tn, d1), lambda i: (i, 0)),    # quality probs
                pl.BlockSpec((tn, d2), lambda i: (i, 0)),    # pc sigmoid
            ],
        ),
        compiler_params=pltpu.CompilerParams(
            dimension_semantics=("parallel",),
            vmem_limit_bytes=32 * 1024 * 1024),
    )(x2d, packed["w1"], packed["b1"], packed["w2"], packed["b2"],
      packed["seg"], packed["consts"])

    return {
        "root": root.reshape(B, T, d0),
        "quality": qual.reshape(B, T, d1),
        "pc": pc.reshape(B, T, d2).astype(jnp.float32),   # matches .float() contract
    }


# ---------------- pure-JAX reference (f32) for correctness check ----------------
def _reference_forward(note_embedding, params):
    def head(x, p):
        w1, b1, w2, b2 = p
        h = jnp.maximum(x @ w1 + b1, 0.0)
        return h @ w2 + b2

    out = {}
    for comp in HARMONY_COMPONENTS:
        out[comp] = jax.nn.softmax(head(note_embedding, params[comp]), axis=2)
    out["pc"] = jax.nn.sigmoid(head(note_embedding, params["pc"]))
    return out


if __name__ == "__main__":
    key = jax.random.PRNGKey(0)
    kparam, kdata = jax.random.split(key)

    B, T = 2, 8  # batch_size=2, harmony_sample_size=8
    params = init_frame_level_decoder_params(kparam)
    packed = pack_frame_level_decoder_params(params)   # packed once, reused every call
    note_embedding = jax.random.normal(kdata, (B, T, EMBEDDING_SIZE), jnp.float32)

    fwd = jax.jit(frame_level_decoder_forward)
    out = jax.block_until_ready(fwd(note_embedding, packed))

    # shape checks
    assert out["root"].shape == (B, T, HARMONY_COMPONENT_DIMS[0])
    assert out["quality"].shape == (B, T, HARMONY_COMPONENT_DIMS[1])
    assert out["pc"].shape == (B, T, NUM_PC)

    # normalization / range checks (normalization is exact: same exp values feed
    # numerator and denominator, exact f32 division)
    assert jnp.allclose(out["root"].sum(-1), 1.0, atol=2e-3)
    assert jnp.allclose(out["quality"].sum(-1), 1.0, atol=2e-3)
    assert bool(((out["pc"] >= -1e-3) & (out["pc"] <= 1.0 + 1e-3)).all())

    # compare against pure-JAX f32 reference (tolerance covers bf16 weight/operand feed)
    ref = _reference_forward(note_embedding, params)
    for k in ("root", "quality", "pc"):
        assert jnp.allclose(out[k], ref[k], atol=1e-2), k

    print("KERNEL_OK")
</pallas_src>

<mosaic_0001>
module attributes {stable_mosaic.version = 11 : i64} {
  func.func @_fused_heads_kernel(%arg0: i32, %arg1: memref<16x32xf32, #tpu.memory_space<vmem>>, %arg2: memref<32x96xbf16, #tpu.memory_space<vmem>>, %arg3: memref<1x96xf32, #tpu.memory_space<vmem>>, %arg4: memref<96x34xbf16, #tpu.memory_space<vmem>>, %arg5: memref<1x34xf32, #tpu.memory_space<vmem>>, %arg6: memref<34x34xbf16, #tpu.memory_space<vmem>>, %arg7: memref<8x34xf32, #tpu.memory_space<vmem>>, %arg8: memref<16x12xf32, #tpu.memory_space<vmem>>, %arg9: memref<16x10xf32, #tpu.memory_space<vmem>>, %arg10: memref<16x12xf32, #tpu.memory_space<vmem>>) attributes {dimension_semantics = [#tpu.dimension_semantics<parallel>], iteration_bounds = array<i64: 1>, scalar_prefetch = 0 : i64, scratch_operands = 0 : i64, tpu.core_type = #tpu.core_type<tc>, window_params = [{transform_indices = @transform_0, window_bounds = array<i64: 16, 32>}, {pipeline_mode = #tpu.pipeline_mode<synchronous>, transform_indices = @transform_1, window_bounds = array<i64: 32, 96>}, {pipeline_mode = #tpu.pipeline_mode<synchronous>, transform_indices = @transform_2, window_bounds = array<i64: 1, 96>}, {pipeline_mode = #tpu.pipeline_mode<synchronous>, transform_indices = @transform_3, window_bounds = array<i64: 96, 34>}, {pipeline_mode = #tpu.pipeline_mode<synchronous>, transform_indices = @transform_4, window_bounds = array<i64: 1, 34>}, {pipeline_mode = #tpu.pipeline_mode<synchronous>, transform_indices = @transform_5, window_bounds = array<i64: 34, 34>}, {pipeline_mode = #tpu.pipeline_mode<synchronous>, transform_indices = @transform_6, window_bounds = array<i64: 8, 34>}, {transform_indices = @transform_7, window_bounds = array<i64: 16, 12>}, {transform_indices = @transform_8, window_bounds = array<i64: 16, 10>}, {transform_indices = @transform_9, window_bounds = array<i64: 16, 12>}]} {
    %c0 = arith.constant 0 : index
    %c0_0 = arith.constant 0 : index
    %0 = vector.load %arg1[%c0, %c0_0] : memref<16x32xf32, #tpu.memory_space<vmem>>, vector<16x32xf32>
    %1 = arith.truncf %0 : vector<16x32xf32> to vector<16x32xbf16>
    %c0_1 = arith.constant 0 : index
    %c0_2 = arith.constant 0 : index
    %2 = vector.load %arg2[%c0_1, %c0_2] : memref<32x96xbf16, #tpu.memory_space<vmem>>, vector<32x96xbf16>
    %cst = arith.constant dense<0.000000e+00> : vector<16x96xf32>
    %3 = tpu.matmul %1, %2, %cst {dimension_numbers = #tpu.dot_dimension_numbers<[1], [0], [0], [1], [0, 0, 1, 1], [], []>} : vector<16x32xbf16>, vector<32x96xbf16>, vector<16x96xf32> -> vector<16x96xf32>
    %c0_3 = arith.constant 0 : index
    %c0_4 = arith.constant 0 : index
    %4 = vector.load %arg3[%c0_3, %c0_4] : memref<1x96xf32, #tpu.memory_space<vmem>>, vector<1x96xf32>
    %5 = vector.broadcast %4 : vector<1x96xf32> to vector<16x96xf32>
    %6 = arith.addf %3, %5 : vector<16x96xf32>
    %cst_5 = arith.constant 0.000000e+00 : f32
    %7 = vector.broadcast %cst_5 : f32 to vector<16x96xf32>
    %8 = arith.maximumf %6, %7 : vector<16x96xf32>
    %9 = arith.truncf %8 : vector<16x96xf32> to vector<16x96xbf16>
    %c0_6 = arith.constant 0 : index
    %c0_7 = arith.constant 0 : index
    %10 = vector.load %arg4[%c0_6, %c0_7] : memref<96x34xbf16, #tpu.memory_space<vmem>>, vector<96x34xbf16>
    %cst_8 = arith.constant dense<0.000000e+00> : vector<16x34xf32>
    %11 = tpu.matmul %9, %10, %cst_8 {dimension_numbers = #tpu.dot_dimension_numbers<[1], [0], [0], [1], [0, 0, 1, 1], [], []>} : vector<16x96xbf16>, vector<96x34xbf16>, vector<16x34xf32> -> vector<16x34xf32>
    %c0_9 = arith.constant 0 : index
    %c0_10 = arith.constant 0 : index
    %12 = vector.load %arg5[%c0_9, %c0_10] : memref<1x34xf32, #tpu.memory_space<vmem>>, vector<1x34xf32>
    %13 = vector.broadcast %12 : vector<1x34xf32> to vector<16x34xf32>
    %14 = arith.addf %11, %13 : vector<16x34xf32>
    %c0_11 = arith.constant 0 : index
    %c0_12 = arith.constant 0 : index
    %15 = vector.load %arg7[%c0_11, %c0_12] : memref<8x34xf32, #tpu.memory_space<vmem>>, vector<1x34xf32>
    %c1 = arith.constant 1 : index
    %c0_13 = arith.constant 0 : index
    %16 = vector.load %arg7[%c1, %c0_13] : memref<8x34xf32, #tpu.memory_space<vmem>>, vector<1x34xf32>
    %c2 = arith.constant 2 : index
    %c0_14 = arith.constant 0 : index
    %17 = vector.load %arg7[%c2, %c0_14] : memref<8x34xf32, #tpu.memory_space<vmem>>, vector<1x34xf32>
    %c3 = arith.constant 3 : index
    %c0_15 = arith.constant 0 : index
    %18 = vector.load %arg7[%c3, %c0_15] : memref<8x34xf32, #tpu.memory_space<vmem>>, vector<1x34xf32>
    %c4 = arith.constant 4 : index
    %c0_16 = arith.constant 0 : index
    %19 = vector.load %arg7[%c4, %c0_16] : memref<8x34xf32, #tpu.memory_space<vmem>>, vector<1x34xf32>
    %20 = vector.broadcast %19 : vector<1x34xf32> to vector<16x34xf32>
    %21 = arith.subf %14, %20 : vector<16x34xf32>
    %cst_17 = arith.constant dense<0xFF800000> : vector<16xf32>
    %22 = vector.multi_reduction <maximumf>, %21, %cst_17 [1] : vector<16x34xf32> to vector<16xf32>
    %23 = vector.shape_cast %22 : vector<16xf32> to vector<16x1xf32>
    %24 = vector.broadcast %15 : vector<1x34xf32> to vector<16x34xf32>
    %25 = vector.broadcast %23 : vector<16x1xf32> to vector<16x34xf32>
    %26 = arith.mulf %24, %25 : vector<16x34xf32>
    %27 = arith.subf %14, %26 : vector<16x34xf32>
    %cst_18 = arith.constant 6.000000e+01 : f32
    %28 = vector.broadcast %cst_18 : f32 to vector<16x34xf32>
    %29 = arith.minimumf %27, %28 : vector<16x34xf32>
    %30 = math.exp %29 : vector<16x34xf32>
    %31 = arith.truncf %30 : vector<16x34xf32> to vector<16x34xbf16>
    %32 = arith.extf %31 : vector<16x34xbf16> to vector<16x34xf32>
    %c0_19 = arith.constant 0 : index
    %c0_20 = arith.constant 0 : index
    %33 = vector.load %arg6[%c0_19, %c0_20] : memref<34x34xbf16, #tpu.memory_space<vmem>>, vector<34x34xbf16>
    %cst_21 = arith.constant dense<0.000000e+00> : vector<16x34xf32>
    %34 = tpu.matmul %31, %33, %cst_21 {dimension_numbers = #tpu.dot_dimension_numbers<[1], [0], [0], [1], [0, 0, 1, 1], [], []>} : vector<16x34xbf16>, vector<34x34xbf16>, vector<16x34xf32> -> vector<16x34xf32>
    %35 = vector.broadcast %16 : vector<1x34xf32> to vector<16x34xf32>
    %36 = arith.addf %34, %35 : vector<16x34xf32>
    %37 = arith.divf %32, %36 : vector<16x34xf32>
    %38 = vector.broadcast %18 : vector<1x34xf32> to vector<16x34xf32>
    %39 = arith.mulf %38, %37 : vector<16x34xf32>
    %40 = vector.broadcast %17 : vector<1x34xf32> to vector<16x34xf32>
    %41 = arith.addf %40, %39 : vector<16x34xf32>
    %42 = vector.extract_strided_slice %41 {offsets = [0, 0], sizes = [16, 12], strides = [1, 1]} : vector<16x34xf32> to vector<16x12xf32>
    %c0_22 = arith.constant 0 : index
    %c0_23 = arith.constant 0 : index
    %43 = vector.load %arg8[%c0_22, %c0_23] : memref<16x12xf32, #tpu.memory_space<vmem>>, vector<16x12xf32>
    tpu.vector_store %arg8[%c0_22, %c0_23], %42 {strides = array<i32>} : memref<16x12xf32, #tpu.memory_space<vmem>>, vector<16x12xf32>,
    %44 = vector.extract_strided_slice %41 {offsets = [0, 12], sizes = [16, 10], strides = [1, 1]} : vector<16x34xf32> to vector<16x10xf32>
    %c0_24 = arith.constant 0 : index
    %c0_25 = arith.constant 0 : index
    %45 = vector.load %arg9[%c0_24, %c0_25] : memref<16x10xf32, #tpu.memory_space<vmem>>, vector<16x10xf32>
    tpu.vector_store %arg9[%c0_24, %c0_25], %44 {strides = array<i32>} : memref<16x10xf32, #tpu.memory_space<vmem>>, vector<16x10xf32>,
    %46 = vector.extract_strided_slice %41 {offsets = [0, 22], sizes = [16, 12], strides = [1, 1]} : vector<16x34xf32> to vector<16x12xf32>
    %c0_26 = arith.constant 0 : index
    %c0_27 = arith.constant 0 : index
    %47 = vector.load %arg10[%c0_26, %c0_27] : memref<16x12xf32, #tpu.memory_space<vmem>>, vector<16x12xf32>
    tpu.vector_store %arg10[%c0_26, %c0_27], %46 {strides = array<i32>} : memref<16x12xf32, #tpu.memory_space<vmem>>, vector<16x12xf32>,
    return
  }
  func.func @transform_0(%arg0: i32) -> (i32, i32) {
    %c0_i32 = arith.constant 0 : i32
    %c0_i32_0 = arith.constant 0 : i32
    return %arg0, %c0_i32 : i32, i32
  }
  func.func @transform_1(%arg0: i32) -> (i32, i32) {
    %c0_i32 = arith.constant 0 : i32
    %c0_i32_0 = arith.constant 0 : i32
    %c0_i32_1 = arith.constant 0 : i32
    return %c0_i32, %c0_i32_0 : i32, i32
  }
  func.func @transform_2(%arg0: i32) -> (i32, i32) {
    %c0_i32 = arith.constant 0 : i32
    %c0_i32_0 = arith.constant 0 : i32
    %c0_i32_1 = arith.constant 0 : i32
    return %c0_i32, %c0_i32_0 : i32, i32
  }
  func.func @transform_3(%arg0: i32) -> (i32, i32) {
    %c0_i32 = arith.constant 0 : i32
    %c0_i32_0 = arith.constant 0 : i32
    %c0_i32_1 = arith.constant 0 : i32
    return %c0_i32, %c0_i32_0 : i32, i32
  }
  func.func @transform_4(%arg0: i32) -> (i32, i32) {
    %c0_i32 = arith.constant 0 : i32
    %c0_i32_0 = arith.constant 0 : i32
    %c0_i32_1 = arith.constant 0 : i32
    return %c0_i32, %c0_i32_0 : i32, i32
  }
  func.func @transform_5(%arg0: i32) -> (i32, i32) {
    %c0_i32 = arith.constant 0 : i32
    %c0_i32_0 = arith.constant 0 : i32
    %c0_i32_1 = arith.constant 0 : i32
    return %c0_i32, %c0_i32_0 : i32, i32
  }
  func.func @transform_6(%arg0: i32) -> (i32, i32) {
    %c0_i32 = arith.constant 0 : i32
    %c0_i32_0 = arith.constant 0 : i32
    %c0_i32_1 = arith.constant 0 : i32
    return %c0_i32, %c0_i32_0 : i32, i32
  }
  func.func @transform_7(%arg0: i32) -> (i32, i32) {
    %c0_i32 = arith.constant 0 : i32
    %c0_i32_0 = arith.constant 0 : i32
    return %arg0, %c0_i32 : i32, i32
  }
  func.func @transform_8(%arg0: i32) -> (i32, i32) {
    %c0_i32 = arith.constant 0 : i32
    %c0_i32_0 = arith.constant 0 : i32
    return %arg0, %c0_i32 : i32, i32
  }
  func.func @transform_9(%arg0: i32) -> (i32, i32) {
    %c0_i32 = arith.constant 0 : i32
    %c0_i32_0 = arith.constant 0 : i32
    return %arg0, %c0_i32 : i32, i32
  }
}

</mosaic_0001>

<llo_original>
// kernel: frame_level_decoder_forward.1
$region0: #{frame_level_decoder_forward.1}
  #allocation0 [shape = 'u32[]', space=smem, size = 0x4, offset = 0x4, fixed_abs, tag = 'smem constant byte address 0x4 - core index']
  #allocation1 [shape = 'u32[144,128]{1,0:T(1,128)}', space=vmem, size = 0x12000, scoped, tag = 'internal scratch']
  %s0 = inlined_call_operand.vmem [shape: f32[16,32], index: 0, kind: input, shape index: {}]
  %s1 = inlined_call_operand.vmem [shape: bf16[32,96], index: 1, kind: input, shape index: {}]
  %s2 = inlined_call_operand.vmem [shape: f32[1,96], index: 2, kind: input, shape index: {}]
  %s3 = inlined_call_operand.vmem [shape: bf16[96,34], index: 3, kind: input, shape index: {}]
  %s4 = inlined_call_operand.vmem [shape: f32[1,34], index: 4, kind: input, shape index: {}]
  %s5 = inlined_call_operand.vmem [shape: bf16[34,34], index: 5, kind: input, shape index: {}]
  %s6 = inlined_call_operand.vmem [shape: f32[8,34], index: 6, kind: input, shape index: {}]
  %s7 = inlined_call_operand.hbm [shape: f32[16,12], index: 7, kind: output, shape index: {0}]
  %s8 = inlined_call_operand.hbm [shape: f32[16,10], index: 8, kind: output, shape index: {1}]
  %s9 = inlined_call_operand.hbm [shape: f32[16,12], index: 9, kind: output, shape index: {2}]
  %10 = xla_tuple %s7, %s8, %s9
  %s11 = sld [smem:[#allocation0]]
  $region54: #{frame_level_decoder_forward.1} parent=0
    _
  %s13 = ssub.s32 1, %s11
  %s14 = scalar_select 0, %s13, %s11
  $region1: #{frame_level_decoder_forward.1} parent=0
    #allocation2 [shape = 'u8[8192]{0}', space=vmem, size = 0x2000, scoped, tag = 'output window, operand 0, single buffered']
    #allocation3 [shape = 's32[1]{0}', space=sflag, size = 0x4, scoped, tag = 'scoped memory for frame_level_decoder_forward.1']
    #allocation4 [shape = 'u8[8192]{0}', space=vmem, size = 0x2000, scoped, tag = 'output window, operand 1, single buffered']
    #allocation5 [shape = 's32[1]{0}', space=sflag, size = 0x4, scoped, tag = 'scoped memory for frame_level_decoder_forward.1']
    #allocation6 [shape = 'u8[8192]{0}', space=vmem, size = 0x2000, scoped, tag = 'output window, operand 2, single buffered']
    %15 = vsyncpa [#allocation3], 0
    %16 = vsyncpa [#allocation5], 0
    // Predicated region
    $region2: #{frame_level_decoder_forward.1} parent=1 // pred_check
      _
    $region3: #{frame_level_decoder_forward.1} parent=1 // pred_check_branch
      %18 = sbr.rel (0) target = $region5
    $region4: #{frame_level_decoder_forward.1} parent=1 // pred_region
      _
    $region5: #{frame_level_decoder_forward.1} parent=1 // pred_fallthru
      _
    // Predicated region
    $region6: #{frame_level_decoder_forward.1} parent=1 // pred_check
      _
    $region7: #{frame_level_decoder_forward.1} parent=1 // pred_check_branch
      %20 = sbr.rel (0) target = $region9
    $region8: #{frame_level_decoder_forward.1} parent=1 // pred_region
      _
    $region9: #{frame_level_decoder_forward.1} parent=1 // pred_fallthru
      _
    // Predicated region
    $region10: #{frame_level_decoder_forward.1} parent=1 // pred_check
      _
    $region11: #{frame_level_decoder_forward.1} parent=1 // pred_check_branch
      %22 = sbr.rel (0) target = $region13
    $region12: #{frame_level_decoder_forward.1} parent=1 // pred_region
      _
    $region13: #{frame_level_decoder_forward.1} parent=1 // pred_fallthru
      _
    // Predicated region
    $region14: #{frame_level_decoder_forward.1} parent=1 // pred_check
      _
    $region15: #{frame_level_decoder_forward.1} parent=1 // pred_check_branch
      %24 = sbr.rel (0) target = $region17
    $region16: #{frame_level_decoder_forward.1} parent=1 // pred_region
      _
    $region17: #{frame_level_decoder_forward.1} parent=1 // pred_fallthru
      _
    // Predicated region
    $region18: #{frame_level_decoder_forward.1} parent=1 // pred_check
      _
    $region19: #{frame_level_decoder_forward.1} parent=1 // pred_check_branch
      %26 = sbr.rel (0) target = $region21
    $region20: #{frame_level_decoder_forward.1} parent=1 // pred_region
      _
    $region21: #{frame_level_decoder_forward.1} parent=1 // pred_fallthru
      _
    // Predicated region
    $region22: #{frame_level_decoder_forward.1} parent=1 // pred_check
      _
    $region23: #{frame_level_decoder_forward.1} parent=1 // pred_check_branch
      %28 = sbr.rel (0) target = $region25
    $region24: #{frame_level_decoder_forward.1} parent=1 // pred_region
      _
    $region25: #{frame_level_decoder_forward.1} parent=1 // pred_fallthru
      _
    // Predicated region
    $region26: #{frame_level_decoder_forward.1} parent=1 // pred_check
      _
    $region27: #{frame_level_decoder_forward.1} parent=1 // pred_check_branch
      %30 = sbr.rel (0) target = $region29
    $region28: #{frame_level_decoder_forward.1} parent=1 // pred_region
      _
    $region29: #{frame_level_decoder_forward.1} parent=1 // pred_fallthru
      _
    %v32 = vld [vmem:[%s0] sm:$0xff]
    %v33 = vld [vmem:[%s0 + $0x8] sm:$0xff]
    %v34 = vpack.c.bf16 %v33, %v32
    %v35 = vld [vmem:[%s1] sm:$0xf]
    %v36 = vld [vmem:[%s1 + $0x4] sm:$0xf]
    %v37 = vld [vmem:[%s1 + $0x8] sm:$0xf]
    %v38 = vld [vmem:[%s1 + $0xc] sm:$0xf]
    %v39 = vld [vmem:[%s2] sm:$0x1]
    %v41 = vlaneseq
    %v42 = vshrl.u32 %v41, 7
    %v43 = vsub.s32 0, %v42
    %v44 = vrot.slane %v39, %v43
    %v50 = vunpack.c.l.b16 %v35
    %v51 = vunpack.c.l.b16 %v36
    %v52 = vunpack.c.l.b16 %v37
    %v53 = vunpack.c.l.b16 %v38
    %v54 = vpack.c.b16 %v51, %v50
    %v55 = vpack.c.b16 %v53, %v52
    %vm58 = vcmask 261120
    %v60 = vsel %vm58, %v34, 0
    %62 = vmatprep.subr.bf16.mxu0 0
    %63 = vmatpush1.bf16.msra.mxu0 0
    %64 = vmatprep.subr.bf16.mxu0 0
    %65 = vmatpush1.bf16.msra.mxu0 0
    %66 = vmatprep.subr.bf16.mxu0 0
    %67 = vmatpush1.bf16.msra.mxu0 0
    %68 = vmatprep.subr.bf16.mxu0 0
    %69 = vmatpush1.bf16.msra.mxu0 0
    %70 = vmatprep.subr.bf16.mxu0 0
    %71 = vmatpush1.bf16.msra.mxu0 0
    %72 = vmatprep.subr.bf16.mxu0 0
    %73 = vmatpush1.bf16.msra.mxu0 0
    %74 = vmatprep.subr.bf16.mxu0 0
    %75 = vmatpush1.bf16.msra.mxu0 %v55
    %76 = vmatprep.subr.bf16.mxu0 0
    %77 = vmatpush1.bf16.msra.mxu0 %v54
    %78 = vmatprep.subr.bf16.mxu0 0
    %79 = vmatpush2.bf16.msra.mxu0 0
    %80 = vmatprep.subr.bf16.mxu0 0
    %81 = vmatpush2.bf16.msra.mxu0 0
    %82 = vmatprep.subr.bf16.mxu0 0
    %83 = vmatpush2.bf16.msra.mxu0 0
    %84 = vmatprep.subr.bf16.mxu0 0
    %85 = vmatpush2.bf16.msra.mxu0 0
    %86 = vmatprep.subr.bf16.mxu0 0
    %87 = vmatpush2.bf16.msra.mxu0 0
    %88 = vmatprep.subr.bf16.mxu0 0
    %89 = vmatpush2.bf16.msra.mxu0 0
    %90 = vmatprep.subr.bf16.mxu0 0
    %91 = vmatpush2.bf16.msra.mxu0 0
    %92 = vmatprep.subr.bf16.mxu0 0
    %93 = vmatpush2.bf16.msra.mxu0 0
    %94 = vmatprep.mubr.bf16.mxu0 0
    %95 = vmatmul.mubr.bf16.gmra.mxu0 %v60
    %v96 = vpop.f32.mrf.mxu0
    %v97 = vadd.f32 %v44, %v96
    %v98 = vpop.f32.mrf.mxu0
    %v99 = vpop.f32.mrf.mxu0
    %v100 = vadd.f32 %v44, %v99
    %v101 = vpop.f32.mrf.mxu0
    %102 = vdwg.mxu0
    %v103 = vmax.f32 %v97, 0.0
    %v104 = vmax.f32 %v100, 0.0
    %v105 = vpack.c.bf16 %v104, %v103
    %v106 = vld [vmem:[%s3] sm:$0xf]
    %v107 = vld [vmem:[%s3 + $0x4] sm:$0xf]
    %v108 = vld [vmem:[%s3 + $0x8] sm:$0xf]
    %v109 = vld [vmem:[%s3 + $0xc] sm:$0xf]
    %v110 = vld [vmem:[%s3 + $0x10] sm:$0xf]
    %v111 = vld [vmem:[%s3 + $0x14] sm:$0xf]
    %v112 = vld [vmem:[%s3 + $0x18] sm:$0xf]
    %v113 = vld [vmem:[%s3 + $0x1c] sm:$0xf]
    %v114 = vld [vmem:[%s3 + $0x20] sm:$0xf]
    %v115 = vld [vmem:[%s3 + $0x24] sm:$0xf]
    %v116 = vld [vmem:[%s3 + $0x28] sm:$0xf]
    %v117 = vld [vmem:[%s3 + $0x2c] sm:$0xf]
    %v118 = vld [vmem:[%s4] sm:$0x1]
    %v120 = vlaneseq
    %v121 = vshrl.u32 %v120, 7
    %v122 = vsub.s32 0, %v121
    %v123 = vrot.slane %v118, %v122
    %v137 = vunpack.c.l.b16 %v106
    %v138 = vunpack.c.l.b16 %v107
    %v139 = vunpack.c.l.b16 %v108
    %v140 = vunpack.c.l.b16 %v109
    %v141 = vunpack.c.l.b16 %v110
    %v142 = vunpack.c.l.b16 %v111
    %v143 = vunpack.c.l.b16 %v112
    %v144 = vunpack.c.l.b16 %v113
    %v145 = vunpack.c.l.b16 %v114
    %v146 = vunpack.c.l.b16 %v115
    %v147 = vunpack.c.l.b16 %v116
    %v148 = vunpack.c.l.b16 %v117
    %v149 = vpack.c.b16 %v138, %v137
    %v150 = vpack.c.b16 %v140, %v139
    %v151 = vpack.c.b16 %v142, %v141
    %v152 = vpack.c.b16 %v144, %v143
    %v153 = vpack.c.b16 %v146, %v145
    %v154 = vpack.c.b16 %v148, %v147
    %vm161 = vcmask 785408
    %v163 = vsel %vm161, %v105, 0
    %165 = vmatprep.subr.bf16.mxu0 0
    %166 = vmatpush1.bf16.msra.mxu0 0
    %167 = vmatprep.subr.bf16.mxu0 0
    %168 = vmatpush1.bf16.msra.mxu0 0
    %169 = vmatprep.subr.bf16.mxu0 0
    %170 = vmatpush1.bf16.msra.mxu0 %v154
    %171 = vmatprep.subr.bf16.mxu0 0
    %172 = vmatpush1.bf16.msra.mxu0 %v153
    %173 = vmatprep.subr.bf16.mxu0 0
    %174 = vmatpush1.bf16.msra.mxu0 %v152
    %175 = vmatprep.subr.bf16.mxu0 0
    %176 = vmatpush1.bf16.msra.mxu0 %v151
    %177 = vmatprep.subr.bf16.mxu0 0
    %178 = vmatpush1.bf16.msra.mxu0 %v150
    %179 = vmatprep.subr.bf16.mxu0 0
    %180 = vmatpush1.bf16.msra.mxu0 %v149
    %181 = vmatprep.subr.bf16.mxu0 0
    %182 = vmatpush2.bf16.msra.mxu0 0
    %183 = vmatprep.subr.bf16.mxu0 0
    %184 = vmatpush2.bf16.msra.mxu0 0
    %185 = vmatprep.subr.bf16.mxu0 0
    %186 = vmatpush2.bf16.msra.mxu0 0
    %187 = vmatprep.subr.bf16.mxu0 0
    %188 = vmatpush2.bf16.msra.mxu0 0
    %189 = vmatprep.subr.bf16.mxu0 0
    %190 = vmatpush2.bf16.msra.mxu0 0
    %191 = vmatprep.subr.bf16.mxu0 0
    %192 = vmatpush2.bf16.msra.mxu0 0
    %193 = vmatprep.subr.bf16.mxu0 0
    %194 = vmatpush2.bf16.msra.mxu0 0
    %195 = vmatprep.subr.bf16.mxu0 0
    %196 = vmatpush2.bf16.msra.mxu0 0
    %197 = vmatprep.mubr.bf16.mxu0 0
    %198 = vmatmul.mubr.bf16.gmra.mxu0 %v163
    %v199 = vpop.f32.mrf.mxu0
    %v200 = vadd.f32 %v123, %v199
    %v201 = vpop.f32.mrf.mxu0
    %v202 = vpop.f32.mrf.mxu0
    %v203 = vadd.f32 %v123, %v202
    %v204 = vpop.f32.mrf.mxu0
    %205 = vdwg.mxu0
    %v206 = vld [vmem:[%s6] sm:$0x1]
    %v207 = vld [vmem:[%s6 + $0x1] sm:$0x1]
    %v208 = vld [vmem:[%s6 + $0x2] sm:$0x1]
    %v209 = vld [vmem:[%s6 + $0x3] sm:$0x1]
    %v210 = vld [vmem:[%s6 + $0x4] sm:$0x1]
    %v211 = vlaneseq
    %v212 = vshrl.u32 %v211, 7
    %v213 = vsub.s32 0, %v212
    %v214 = vrot.slane %v210, %v213
    %v215 = vsub.f32 %v200, %v214
    %v216 = vsub.f32 %v203, %v214
    %vm217 = vcmask 277504
    %v218 = vsel %vm217, %v215, -inf
    %219 = vmax.xlane.f32.xlu0 %v218
    %v220 = vpop.xlane.xlu0 %219
    %v221 = vsel %vm217, %v216, -inf
    %222 = vmax.xlane.f32.xlu0 %v221
    %v223 = vpop.xlane.xlu0 %222
    %v224 = vlaneseq
    %v225 = vshrl.u32 %v224, 7
    %v226 = vsub.s32 0, %v225
    %v227 = vrot.slane %v206, %v226
    %v228 = vmul.f32 %v227, %v220
    %v229 = vmul.f32 %v227, %v223
    %v230 = vsub.f32 %v200, %v228
    %v231 = vsub.f32 %v203, %v229
    %v232 = vmin.f32 %v230, 60.0
    %v233 = vmin.f32 %v231, 60.0
    %v234 = vmul.f32 %v232, 1.442695
    %v235 = vpow.pop %v234
    %v236 = vmul.f32 %v233, 1.442695
    %v237 = vpow.pop %v236
    %v238 = vpack.c.bf16 %v237, %v235
    %v239 = vunpack.c.l.bf16 %v238
    %v240 = vunpack.c.h.bf16 %v238
    %v241 = vld [vmem:[%s5] sm:$0xf]
    %v242 = vld [vmem:[%s5 + $0x4] sm:$0xf]
    %v243 = vld [vmem:[%s5 + $0x8] sm:$0xf]
    %v244 = vld [vmem:[%s5 + $0xc] sm:$0xf]
    %v245 = vld [vmem:[%s5 + $0x10] sm:$0x1]
    %v246 = vlaneseq
    %v247 = vshrl.u32 %v246, 7
    %v248 = vsub.s32 0, %v247
    %v249 = vrot.slane %v207, %v248
    %v255 = vunpack.c.l.b16 %v241
    %v256 = vunpack.c.l.b16 %v242
    %v257 = vunpack.c.l.b16 %v243
    %v258 = vunpack.c.l.b16 %v244
    %v259 = vunpack.c.l.b16 %v245
    %v260 = vpack.c.b16 %v256, %v255
    %v261 = vpack.c.b16 %v258, %v257
    %v262 = vpack.c.b16 %v259, %v259
    %v266 = vsel %vm217, %v238, 0
    %vm268 = vcmask 1040384
    %v270 = vsel %vm268, %v262, 0
    %272 = vmatprep.subr.bf16.mxu0 0
    %273 = vmatpush1.bf16.msra.mxu0 0
    %274 = vmatprep.subr.bf16.mxu0 0
    %275 = vmatpush1.bf16.msra.mxu0 0
    %276 = vmatprep.subr.bf16.mxu0 0
    %277 = vmatpush1.bf16.msra.mxu0 0
    %278 = vmatprep.subr.bf16.mxu0 0
    %279 = vmatpush1.bf16.msra.mxu0 0
    %280 = vmatprep.subr.bf16.mxu0 0
    %281 = vmatpush1.bf16.msra.mxu0 0
    %282 = vmatprep.subr.bf16.mxu0 0
    %283 = vmatpush1.bf16.msra.mxu0 %v270
    %284 = vmatprep.subr.bf16.mxu0 0
    %285 = vmatpush1.bf16.msra.mxu0 %v261
    %286 = vmatprep.subr.bf16.mxu0 0
    %287 = vmatpush1.bf16.msra.mxu0 %v260
    %288 = vmatprep.subr.bf16.mxu0 0
    %289 = vmatpush2.bf16.msra.mxu0 0
    %290 = vmatprep.subr.bf16.mxu0 0
    %291 = vmatpush2.bf16.msra.mxu0 0
    %292 = vmatprep.subr.bf16.mxu0 0
    %293 = vmatpush2.bf16.msra.mxu0 0
    %294 = vmatprep.subr.bf16.mxu0 0
    %295 = vmatpush2.bf16.msra.mxu0 0
    %296 = vmatprep.subr.bf16.mxu0 0
    %297 = vmatpush2.bf16.msra.mxu0 0
    %298 = vmatprep.subr.bf16.mxu0 0
    %299 = vmatpush2.bf16.msra.mxu0 0
    %300 = vmatprep.subr.bf16.mxu0 0
    %301 = vmatpush2.bf16.msra.mxu0 0
    %302 = vmatprep.subr.bf16.mxu0 0
    %303 = vmatpush2.bf16.msra.mxu0 0
    %304 = vmatprep.mubr.bf16.mxu0 0
    %305 = vmatmul.mubr.bf16.gmra.mxu0 %v266
    %v306 = vpop.f32.mrf.mxu0
    %v307 = vadd.f32 %v249, %v306
    %v308 = vpop.f32.mrf.mxu0
    %v309 = vpop.f32.mrf.mxu0
    %v310 = vadd.f32 %v249, %v309
    %v311 = vpop.f32.mrf.mxu0
    %312 = vdwg.mxu0
    %v313 = vrcp.pop %v307
    %v314 = vmul.f32 %v239, %v313
    %v315 = vrcp.pop %v310
    %v316 = vmul.f32 %v240, %v315
    %v317 = vlaneseq
    %v318 = vshrl.u32 %v317, 7
    %v319 = vsub.s32 0, %v318
    %v320 = vrot.slane %v209, %v319
    %v321 = vmul.f32 %v320, %v314
    %v322 = vmul.f32 %v320, %v316
    %v323 = vlaneseq
    %v324 = vshrl.u32 %v323, 7
    %v325 = vsub.s32 0, %v324
    %v326 = vrot.slane %v208, %v325
    %v327 = vadd.f32 %v326, %v321
    %v328 = vadd.f32 %v326, %v322
    %vm329 = vcmask 97280
    %330 = vst.msk [vmem:[#allocation2] sm:$0xff] %vm329, %v327
    %331 = vst.msk [vmem:[#allocation2 + $0x8] sm:$0xff] %vm329, %v328
    %334 = vrot.lane.b32.xlu0 %v327, 116
    %v335 = vpop.permute.xlu0 %334
    %336 = vrot.lane.b32.xlu0 %v328, 116
    %v337 = vpop.permute.xlu0 %336
    %vm340 = vcmask 80896
    %341 = vst.msk [vmem:[#allocation4] sm:$0xff] %vm340, %v335
    %342 = vst.msk [vmem:[#allocation4 + $0x8] sm:$0xff] %vm340, %v337
    %343 = vrot.lane.b32.xlu0 %v327, 106
    %v344 = vpop.permute.xlu0 %343
    %345 = vrot.lane.b32.xlu0 %v328, 106
    %v346 = vpop.permute.xlu0 %345
    %349 = vst.msk [vmem:[#allocation6] sm:$0xff] %vm329, %v344
    %350 = vst.msk [vmem:[#allocation6 + $0x8] sm:$0xff] %vm329, %v346
    // Predicated region
    $region30: #{frame_level_decoder_forward.1} parent=1 // pred_check
      _
    $region31: #{frame_level_decoder_forward.1} parent=1 // pred_check_branch
      %352 = sbr.rel (0) target = $region33
    $region32: #{frame_level_decoder_forward.1} parent=1 // pred_region
      %s354 = ssub.s32 256, 256
      %355 = vsyncadd [#allocation3], %s354
      %s356 = sshll.u32 [#allocation2], 4
      %s357 = int_to_ptr.vmem [resolvable:$true] %s356
      %362 = dma.vmem_to_hbm [thread:$0]  %s357, 256, %s7, [#allocation3], 128, 128, 8
    $region33: #{frame_level_decoder_forward.1} parent=1 // pred_fallthru
      _
    // Predicated region
    $region34: #{frame_level_decoder_forward.1} parent=1 // pred_check
      _
    $region35: #{frame_level_decoder_forward.1} parent=1 // pred_check_branch
      %364 = sbr.rel (0) target = $region37
    $region36: #{frame_level_decoder_forward.1} parent=1 // pred_region
      %s366 = ssub.s32 256, 256
      %367 = vsyncadd [#allocation5], %s366
      %s368 = sshll.u32 [#allocation4], 4
      %s369 = int_to_ptr.vmem [resolvable:$true] %s368
      %374 = dma.vmem_to_hbm [thread:$0]  %s369, 256, %s8, [#allocation5], 128, 128, 8
    $region37: #{frame_level_decoder_forward.1} parent=1 // pred_fallthru
      _
    // Predicated region
    $region38: #{frame_level_decoder_forward.1} parent=1 // pred_check
      _
    $region39: #{frame_level_decoder_forward.1} parent=1 // pred_check_branch
      %376 = sbr.rel (0) target = $region41
    $region40: #{frame_level_decoder_forward.1} parent=1 // pred_region
      %s378 = ssub.s32 256, 256
      %379 = vsyncadd [#allocation5], %s378
      %s380 = sshll.u32 [#allocation6], 4
      %s381 = int_to_ptr.vmem [resolvable:$true] %s380
      %386 = dma.vmem_to_hbm [thread:$0]  %s381, 256, %s9, [#allocation5], 128, 128, 8
    $region41: #{frame_level_decoder_forward.1} parent=1 // pred_fallthru
      _
    // Predicated region
    $region42: #{frame_level_decoder_forward.1} parent=1 // pred_check
      _
    $region43: #{frame_level_decoder_forward.1} parent=1 // pred_check_branch
      %388 = sbr.rel (0) target = $region45
    $region44: #{frame_level_decoder_forward.1} parent=1 // pred_region
      %389 = dma.done [#allocation3], 256
    $region45: #{frame_level_decoder_forward.1} parent=1 // pred_fallthru
      _
    // Predicated region
    $region46: #{frame_level_decoder_forward.1} parent=1 // pred_check
      _
    $region47: #{frame_level_decoder_forward.1} parent=1 // pred_check_branch
      %391 = sbr.rel (0) target = $region49
    $region48: #{frame_level_decoder_forward.1} parent=1 // pred_region
      %392 = dma.done [#allocation5], 256
    $region49: #{frame_level_decoder_forward.1} parent=1 // pred_fallthru
      _
    // Predicated region
    $region50: #{frame_level_decoder_forward.1} parent=1 // pred_check
      _
    $region51: #{frame_level_decoder_forward.1} parent=1 // pred_check_branch
      %394 = sbr.rel (0) target = $region53
    $region52: #{frame_level_decoder_forward.1} parent=1 // pred_region
      %395 = dma.done [#allocation5], 256
    $region53: #{frame_level_decoder_forward.1} parent=1 // pred_fallthru
      _
    %396 = vsyncpa [#allocation3], 1
    %397 = vsyncpa [#allocation5], 1

</llo_original>
